<compile_context>
chip_gen: v6e
topology: v6e:2x2x1
jax: 0.10.0
libtpu: 0.0.40
codegen_flags: <defaults>
</compile_context>

<pallas_src>
import math
from functools import partial

import jax
import jax.numpy as jnp
from jax.experimental import pallas as pl
from jax.experimental.pallas import tpu as pltpu

_SQRT_2_OVER_PI = math.sqrt(2.0 / math.pi)


def _gelu_tanh(x):
    # PyTorch nn.GELU(approximate='tanh'):
    # 0.5 * x * (1 + tanh(sqrt(2/pi) * (x + 0.044715 * x^3)))
    return 0.5 * x * (1.0 + jnp.tanh(_SQRT_2_OVER_PI * (x + 0.044715 * x * x * x)))


# --------------------------------------------------------------------------
# Kernels
# --------------------------------------------------------------------------

def _mlp_kernel_resident(x_ref, w1_ref, b1_ref, w2_ref, b2_ref, o_ref):
    """Full weights resident in VMEM: one fused pass per row tile."""
    x = x_ref[...].astype(w1_ref.dtype)                       # cast to bf16 in-kernel
    h = jnp.dot(x, w1_ref[...], preferred_element_type=jnp.float32) + b1_ref[...]
    g = _gelu_tanh(h).astype(w2_ref.dtype)
    out = jnp.dot(g, w2_ref[...], preferred_element_type=jnp.float32) + b2_ref[...]
    o_ref[...] = out.astype(o_ref.dtype)


def _mlp_kernel_tiled_f32out(x_ref, w1_ref, b1_ref, w2_ref, b2_ref, o_ref):
    """Hidden dim tiled; f32 output block is resident across j -> accumulate in place."""
    j = pl.program_id(1)

    @pl.when(j == 0)
    def _init():
        o_ref[...] = jnp.zeros_like(o_ref)

    x = x_ref[...].astype(w1_ref.dtype)
    h = jnp.dot(x, w1_ref[...], preferred_element_type=jnp.float32) + b1_ref[...]
    g = _gelu_tanh(h).astype(w2_ref.dtype)
    o_ref[...] += jnp.dot(g, w2_ref[...], preferred_element_type=jnp.float32)

    @pl.when(j == pl.num_programs(1) - 1)
    def _finalize():
        o_ref[...] = o_ref[...] + b2_ref[...]


def _mlp_kernel_tiled(x_ref, w1_ref, b1_ref, w2_ref, b2_ref, o_ref, acc_ref):
    """Hidden dim tiled with an explicit f32 VMEM accumulator (non-f32 outputs)."""
    j = pl.program_id(1)

    @pl.when(j == 0)
    def _init():
        acc_ref[...] = jnp.zeros_like(acc_ref)

    x = x_ref[...].astype(w1_ref.dtype)
    h = jnp.dot(x, w1_ref[...], preferred_element_type=jnp.float32) + b1_ref[...]
    g = _gelu_tanh(h).astype(w2_ref.dtype)
    acc_ref[...] += jnp.dot(g, w2_ref[...], preferred_element_type=jnp.float32)

    @pl.when(j == pl.num_programs(1) - 1)
    def _finalize():
        o_ref[...] = (acc_ref[...] + b2_ref[...]).astype(o_ref.dtype)


# --------------------------------------------------------------------------
# Tiling / VMEM planning (trace-time, static)
# --------------------------------------------------------------------------

def _round_up(n, m):
    return ((n + m - 1) // m) * m


def _fits(tm, th, D, H, x_bytes, out_bytes, out_is_f32, budget):
    """Approximate VMEM footprint of one pipelined configuration."""
    resident = (th == H)
    wbuf = 1 if resident else 2                       # single vs double buffered slabs
    weights = wbuf * (2 * D * th * 2 + th * 4)        # W1+W2 slabs (bf16) + b1 slab (f32)
    misc = D * 4                                      # b2
    io = 2 * tm * D * (x_bytes + out_bytes)           # double-buffered x / out tiles
    acc = 0 if (resident or out_is_f32) else tm * D * 4
    inter = tm * th * 6                               # h (f32) + g (bf16) temporaries
    return weights + misc + io + acc + inter <= budget


def _plan(M, D, H, x_bytes, out_bytes, out_is_f32, tm_req, th_req):
    try:
        info = pltpu.get_tpu_info()
        vmem_cap = int(getattr(info, "vmem_capacity_bytes", 128 * 1024 * 1024))
    except Exception:
        vmem_cap = 128 * 1024 * 1024
    # ~7/8 of physical VMEM, capped at 100 MiB (=> ~56 MiB on v7x, ~100 MiB on v5e/v6e)
    vmem_limit = min((7 * vmem_cap) // 8, 100 * 1024 * 1024)
    budget = max(vmem_limit - (6 << 20), vmem_limit // 2)   # headroom for compiler scratch

    try:
        num_tc = max(1, int(getattr(jax.devices()[0], "num_cores", 1)))
    except Exception:
        num_tc = 1

    M8 = _round_up(M, 8)

    # ---- row tile: large for arithmetic intensity, but bound pad waste to ~15% ----
    if tm_req is not None:
        tm = max(8, min(_round_up(tm_req, 8), M8))
    else:
        pad_limit = max(int(0.15 * M), 8)
        tm = 8
        for cand in (1024, 512, 256, 128, 64, 32, 16, 8):
            if cand <= M8 and _round_up(M, cand) - M <= pad_limit:
                tm = cand
                break
    # Give every TensorCore a row tile (v7x has 2 TCs per chip).
    while (num_tc > 1 and _round_up(M, tm) // tm < num_tc
           and tm > 8 and tm % 16 == 0):
        tm //= 2

    # ---- hidden tile: keep full weights resident whenever they fit VMEM ----
    if th_req is not None and H % th_req == 0:
        th = th_req
    elif _fits(tm, H, D, H, x_bytes, out_bytes, out_is_f32, budget):
        th = H
    else:
        th = None
        for cand in (2048, 1024, 512, 256, 128):
            if cand < H and H % cand == 0 and _fits(tm, cand, D, H, x_bytes,
                                                    out_bytes, out_is_f32, budget):
                th = cand
                break
        if th is None:
            th = next((c for c in (256, 128) if c < H and H % c == 0), H)
            while tm > 8 and not _fits(tm, th, D, H, x_bytes, out_bytes,
                                       out_is_f32, budget):
                tm = max(8, tm // 2)

    return tm, th, vmem_limit


# --------------------------------------------------------------------------
# Public wrapper
# --------------------------------------------------------------------------

@partial(jax.jit, static_argnames=("tm", "th"))
def mlp_pallas(x, w1, b1, w2, b2, *, tm=None, th=None):
    """Fused GPT-2 MLP: gelu_tanh(x @ W1 + b1) @ W2 + b2.

    x:  (B, T, D)
    w1: (D, H)  (transposed vs. PyTorch nn.Linear.weight), H = 4*D for GPT-2
    b1: (H,)
    w2: (H, D)
    b2: (D,)
    """
    B, T, D = x.shape
    H = w1.shape[1]
    M = B * T
    out_dtype = x.dtype
    out_is_f32 = (out_dtype == jnp.float32)
    x_bytes = x.dtype.itemsize

    tm_eff, th_eff, vmem_limit = _plan(M, D, H, x_bytes, x_bytes, out_is_f32, tm, th)
    M_pad = _round_up(M, tm_eff)
    num_h = H // th_eff
    rows = M_pad // tm_eff

    # Keep x in its native dtype (bf16 cast happens inside the kernel); only pad rows.
    x2 = x.reshape(M, D)
    if M_pad != M:
        x2 = jnp.pad(x2, ((0, M_pad - M), (0, 0)))
    # MXU operands in bf16 (no-op if the caller already stores bf16 weights).
    w1b = w1.astype(jnp.bfloat16)
    w2b = w2.astype(jnp.bfloat16)
    b1_2 = b1.reshape(1, H).astype(jnp.float32)
    b2_2 = b2.reshape(1, D).astype(jnp.float32)

    single = dict(pipeline_mode=pl.Buffered(1))   # constant-index blocks: no double-buffer

    weight_bytes = (w1b.size + w2b.size) * 2
    cost = pl.CostEstimate(
        flops=4 * M_pad * D * H,                               # two matmuls: 2*M*D*H each
        transcendentals=M_pad * H,                             # tanh in the GELU
        bytes_accessed=(M_pad * D * (x_bytes + out_dtype.itemsize)
                        + weight_bytes * (rows if num_h > 1 else 1)
                        + (H + D) * 4),
    )
    compiler_params = pltpu.CompilerParams(
        dimension_semantics=("parallel",) if num_h == 1 else ("parallel", "arbitrary"),
        vmem_limit_bytes=vmem_limit,
    )

    if num_h == 1:
        # Full weights resident in VMEM, fetched from HBM exactly once.
        grid_spec = pltpu.PrefetchScalarGridSpec(
            num_scalar_prefetch=0,
            grid=(rows,),
            in_specs=[
                pl.BlockSpec((tm_eff, D), lambda i: (i, 0)),          # x rows
                pl.BlockSpec((D, H), lambda i: (0, 0), **single),     # W1 (resident)
                pl.BlockSpec((1, H), lambda i: (0, 0), **single),     # b1
                pl.BlockSpec((H, D), lambda i: (0, 0), **single),     # W2 (resident)
                pl.BlockSpec((1, D), lambda i: (0, 0), **single),     # b2
            ],
            out_specs=pl.BlockSpec((tm_eff, D), lambda i: (i, 0)),
        )
        kernel = _mlp_kernel_resident
    else:
        in_specs = [
            pl.BlockSpec((tm_eff, D), lambda i, j: (i, 0)),           # x rows (reused over j)
            pl.BlockSpec((D, th_eff), lambda i, j: (0, j)),           # W1 slab
            pl.BlockSpec((1, th_eff), lambda i, j: (0, j)),           # b1 slab
            pl.BlockSpec((th_eff, D), lambda i, j: (j, 0)),           # W2 slab
            pl.BlockSpec((1, D), lambda i, j: (0, 0), **single),      # b2
        ]
        out_specs = pl.BlockSpec((tm_eff, D), lambda i, j: (i, 0))
        if out_is_f32:
            kernel = _mlp_kernel_tiled_f32out
            scratch = []
        else:
            kernel = _mlp_kernel_tiled
            scratch = [pltpu.VMEM((tm_eff, D), jnp.float32)]
        grid_spec = pltpu.PrefetchScalarGridSpec(
            num_scalar_prefetch=0,
            grid=(rows, num_h),                                       # reduction axis last
            in_specs=in_specs,
            out_specs=out_specs,
            scratch_shapes=scratch,
        )

    out = pl.pallas_call(
        kernel,
        out_shape=jax.ShapeDtypeStruct((M_pad, D), out_dtype),
        grid_spec=grid_spec,
        compiler_params=compiler_params,
        cost_estimate=cost,
    )(x2, w1b, b1_2, w2b, b2_2)

    return out[:M].reshape(B, T, D)


# --------------------------------------------------------------------------
# Reference (mirrors the kernel numerics: bf16 MXU operands, f32 accumulation)
# --------------------------------------------------------------------------

def mlp_reference(x, w1, b1, w2, b2):
    xb = x.astype(jnp.bfloat16)
    w1b = w1.astype(jnp.bfloat16)
    w2b = w2.astype(jnp.bfloat16)
    h = jnp.einsum("btd,dh->bth", xb, w1b,
                   preferred_element_type=jnp.float32) + b1.astype(jnp.float32)
    g = _gelu_tanh(h).astype(jnp.bfloat16)
    out = jnp.einsum("bth,hd->btd", g, w2b,
                     preferred_element_type=jnp.float32) + b2.astype(jnp.float32)
    return out.astype(x.dtype)


if __name__ == "__main__":
    key = jax.random.PRNGKey(0)

    def make_params(k, D, H):
        kw1, kw2, kb1, kb2 = jax.random.split(k, 4)
        # Weights stored in bf16 outside the kernel (no per-call cast traffic).
        w1 = (0.02 * jax.random.normal(kw1, (D, H), dtype=jnp.float32)).astype(jnp.bfloat16)
        b1 = 0.02 * jax.random.normal(kb1, (H,), dtype=jnp.float32)
        w2 = (0.02 * jax.random.normal(kw2, (H, D), dtype=jnp.float32)).astype(jnp.bfloat16)
        b2 = 0.02 * jax.random.normal(kb2, (D,), dtype=jnp.float32)
        return w1, b1, w2, b2

    def check(y, y_ref, tag, atol, rtol):
        yf = y.astype(jnp.float32)
        rf = y_ref.astype(jnp.float32)
        err = float(jnp.max(jnp.abs(yf - rf)))
        assert bool(jnp.allclose(yf, rf, atol=atol, rtol=rtol)), \
            f"{tag} mismatch (max abs err {err})"

    # Config A: small GPT-2-like MLP (n_embd=32 -> hidden=128); ragged token
    # count (M=14) exercises the zero-pad path; weights fully resident.
    kx, kp, key = jax.random.split(key, 3)
    B, T, D = 2, 7, 32
    x = jax.random.normal(kx, (B, T, D), dtype=jnp.float32)
    w1, b1, w2, b2 = make_params(kp, D, 4 * D)
    y = jax.block_until_ready(mlp_pallas(x, w1, b1, w2, b2))
    assert y.shape == (B, T, D)
    check(y, mlp_reference(x, w1, b1, w2, b2), "config A", 2e-4, 2e-3)

    # Config B: forced hidden-dim tiling (num_h = 4) with f32 output ->
    # accumulation happens directly in the resident output block (no scratch).
    kx, kp, key = jax.random.split(key, 3)
    B, T, D = 2, 64, 128
    x = jax.random.normal(kx, (B, T, D), dtype=jnp.float32)
    w1, b1, w2, b2 = make_params(kp, D, 4 * D)
    y = jax.block_until_ready(mlp_pallas(x, w1, b1, w2, b2, th=128))
    check(y, mlp_reference(x, w1, b1, w2, b2), "config B", 2e-4, 2e-3)

    # Config C: bf16 activations + forced hidden-dim tiling -> f32 VMEM
    # accumulator scratch, bf16 output written once at the last H step.
    kx, key = jax.random.split(key, 2)
    xb = jax.random.normal(kx, (B, T, D), dtype=jnp.bfloat16)
    y = jax.block_until_ready(mlp_pallas(xb, w1, b1, w2, b2, th=128))
    check(y, mlp_reference(xb, w1, b1, w2, b2), "config C", 2e-2, 2e-2)

    print("KERNEL_OK")
</pallas_src>

<mosaic_0001>
module attributes {stable_mosaic.version = 11 : i64} {
  func.func @_mlp_kernel_resident(%arg0: i32, %arg1: memref<16x32xf32, #tpu.memory_space<vmem>>, %arg2: memref<32x128xbf16, #tpu.memory_space<vmem>>, %arg3: memref<1x128xf32, #tpu.memory_space<vmem>>, %arg4: memref<128x32xbf16, #tpu.memory_space<vmem>>, %arg5: memref<1x32xf32, #tpu.memory_space<vmem>>, %arg6: memref<16x32xf32, #tpu.memory_space<vmem>>) attributes {dimension_semantics = [#tpu.dimension_semantics<parallel>], iteration_bounds = array<i64: 1>, scalar_prefetch = 0 : i64, scratch_operands = 0 : i64, tpu.core_type = #tpu.core_type<tc>, window_params = [{transform_indices = @transform_0, window_bounds = array<i64: 16, 32>}, {pipeline_mode = #tpu.pipeline_mode<synchronous>, transform_indices = @transform_1, window_bounds = array<i64: 32, 128>}, {pipeline_mode = #tpu.pipeline_mode<synchronous>, transform_indices = @transform_2, window_bounds = array<i64: 1, 128>}, {pipeline_mode = #tpu.pipeline_mode<synchronous>, transform_indices = @transform_3, window_bounds = array<i64: 128, 32>}, {pipeline_mode = #tpu.pipeline_mode<synchronous>, transform_indices = @transform_4, window_bounds = array<i64: 1, 32>}, {transform_indices = @transform_5, window_bounds = array<i64: 16, 32>}]} {
    %c0 = arith.constant 0 : index
    %c0_0 = arith.constant 0 : index
    %0 = vector.load %arg1[%c0, %c0_0] : memref<16x32xf32, #tpu.memory_space<vmem>>, vector<16x32xf32>
    %1 = arith.truncf %0 : vector<16x32xf32> to vector<16x32xbf16>
    %c0_1 = arith.constant 0 : index
    %c0_2 = arith.constant 0 : index
    %2 = vector.load %arg2[%c0_1, %c0_2] : memref<32x128xbf16, #tpu.memory_space<vmem>>, vector<32x128xbf16>
    %cst = arith.constant dense<0.000000e+00> : vector<16x128xf32>
    %3 = tpu.matmul %1, %2, %cst {dimension_numbers = #tpu.dot_dimension_numbers<[1], [0], [0], [1], [0, 0, 1, 1], [], []>} : vector<16x32xbf16>, vector<32x128xbf16>, vector<16x128xf32> -> vector<16x128xf32>
    %c0_3 = arith.constant 0 : index
    %c0_4 = arith.constant 0 : index
    %4 = vector.load %arg3[%c0_3, %c0_4] : memref<1x128xf32, #tpu.memory_space<vmem>>, vector<1x128xf32>
    %5 = vector.broadcast %4 : vector<1x128xf32> to vector<16x128xf32>
    %6 = arith.addf %3, %5 : vector<16x128xf32>
    %cst_5 = arith.constant 5.000000e-01 : f32
    %7 = vector.broadcast %cst_5 : f32 to vector<16x128xf32>
    %8 = arith.mulf %7, %6 : vector<16x128xf32>
    %cst_6 = arith.constant 4.471500e-02 : f32
    %9 = vector.broadcast %cst_6 : f32 to vector<16x128xf32>
    %10 = arith.mulf %9, %6 : vector<16x128xf32>
    %11 = arith.mulf %10, %6 : vector<16x128xf32>
    %12 = arith.mulf %11, %6 : vector<16x128xf32>
    %13 = arith.addf %6, %12 : vector<16x128xf32>
    %cst_7 = arith.constant 0.797884583 : f32
    %14 = vector.broadcast %cst_7 : f32 to vector<16x128xf32>
    %15 = arith.mulf %14, %13 : vector<16x128xf32>
    %16 = math.tanh %15 : vector<16x128xf32>
    %cst_8 = arith.constant 1.000000e+00 : f32
    %17 = vector.broadcast %cst_8 : f32 to vector<16x128xf32>
    %18 = arith.addf %17, %16 : vector<16x128xf32>
    %19 = arith.mulf %8, %18 : vector<16x128xf32>
    %20 = arith.truncf %19 : vector<16x128xf32> to vector<16x128xbf16>
    %c0_9 = arith.constant 0 : index
    %c0_10 = arith.constant 0 : index
    %21 = vector.load %arg4[%c0_9, %c0_10] : memref<128x32xbf16, #tpu.memory_space<vmem>>, vector<128x32xbf16>
    %cst_11 = arith.constant dense<0.000000e+00> : vector<16x32xf32>
    %22 = tpu.matmul %20, %21, %cst_11 {dimension_numbers = #tpu.dot_dimension_numbers<[1], [0], [0], [1], [0, 0, 1, 1], [], []>} : vector<16x128xbf16>, vector<128x32xbf16>, vector<16x32xf32> -> vector<16x32xf32>
    %c0_12 = arith.constant 0 : index
    %c0_13 = arith.constant 0 : index
    %23 = vector.load %arg5[%c0_12, %c0_13] : memref<1x32xf32, #tpu.memory_space<vmem>>, vector<1x32xf32>
    %24 = vector.broadcast %23 : vector<1x32xf32> to vector<16x32xf32>
    %25 = arith.addf %22, %24 : vector<16x32xf32>
    %c0_14 = arith.constant 0 : index
    %c0_15 = arith.constant 0 : index
    %26 = vector.load %arg6[%c0_14, %c0_15] : memref<16x32xf32, #tpu.memory_space<vmem>>, vector<16x32xf32>
    tpu.vector_store %arg6[%c0_14, %c0_15], %25 {strides = array<i32>} : memref<16x32xf32, #tpu.memory_space<vmem>>, vector<16x32xf32>,
    return
  }
  func.func @transform_0(%arg0: i32) -> (i32, i32) {
    %c0_i32 = arith.constant 0 : i32
    %c0_i32_0 = arith.constant 0 : i32
    return %arg0, %c0_i32 : i32, i32
  }
  func.func @transform_1(%arg0: i32) -> (i32, i32) {
    %c0_i32 = arith.constant 0 : i32
    %c0_i32_0 = arith.constant 0 : i32
    %c0_i32_1 = arith.constant 0 : i32
    return %c0_i32, %c0_i32_0 : i32, i32
  }
  func.func @transform_2(%arg0: i32) -> (i32, i32) {
    %c0_i32 = arith.constant 0 : i32
    %c0_i32_0 = arith.constant 0 : i32
    %c0_i32_1 = arith.constant 0 : i32
    return %c0_i32, %c0_i32_0 : i32, i32
  }
  func.func @transform_3(%arg0: i32) -> (i32, i32) {
    %c0_i32 = arith.constant 0 : i32
    %c0_i32_0 = arith.constant 0 : i32
    %c0_i32_1 = arith.constant 0 : i32
    return %c0_i32, %c0_i32_0 : i32, i32
  }
  func.func @transform_4(%arg0: i32) -> (i32, i32) {
    %c0_i32 = arith.constant 0 : i32
    %c0_i32_0 = arith.constant 0 : i32
    %c0_i32_1 = arith.constant 0 : i32
    return %c0_i32, %c0_i32_0 : i32, i32
  }
  func.func @transform_5(%arg0: i32) -> (i32, i32) {
    %c0_i32 = arith.constant 0 : i32
    %c0_i32_0 = arith.constant 0 : i32
    return %arg0, %c0_i32 : i32, i32
  }
}

</mosaic_0001>

<llo_original>
// kernel: mlp_pallas.1
$region0: #{mlp_pallas.1}
  #allocation0 [shape = 'u32[]', space=smem, size = 0x4, offset = 0x4, fixed_abs, tag = 'smem constant byte address 0x4 - core index']
  #allocation1 [shape = 'u32[144,128]{1,0:T(1,128)}', space=vmem, size = 0x12000, scoped, tag = 'internal scratch']
  %s0 = inlined_call_operand.vmem [shape: f32[16,32], index: 0, kind: input, shape index: {}]
  %s1 = inlined_call_operand.vmem [shape: bf16[32,128], index: 1, kind: input, shape index: {}]
  %s2 = inlined_call_operand.vmem [shape: f32[1,128], index: 2, kind: input, shape index: {}]
  %s3 = inlined_call_operand.vmem [shape: bf16[128,32], index: 3, kind: input, shape index: {}]
  %s4 = inlined_call_operand.vmem [shape: f32[1,32], index: 4, kind: input, shape index: {}]
  %s5 = inlined_call_operand.vmem [shape: f32[16,32], index: 5, kind: output, shape index: {}]
  %s6 = sld [smem:[#allocation0]]
  $region30: #{mlp_pallas.1} parent=0
    _
  %s8 = ssub.s32 1, %s6
  %s9 = scalar_select 0, %s8, %s6
  // Predicated region
  $region2: #{mlp_pallas.1} parent=0 // pred_check
    _
  $region3: #{mlp_pallas.1} parent=0 // pred_check_branch
    %11 = sbr.rel (0) target = $region5
  $region4: #{mlp_pallas.1} parent=0 // pred_region
    _
  $region5: #{mlp_pallas.1} parent=0 // pred_fallthru
    _
  // Predicated region
  $region6: #{mlp_pallas.1} parent=0 // pred_check
    _
  $region7: #{mlp_pallas.1} parent=0 // pred_check_branch
    %13 = sbr.rel (0) target = $region9
  $region8: #{mlp_pallas.1} parent=0 // pred_region
    _
  $region9: #{mlp_pallas.1} parent=0 // pred_fallthru
    _
  // Predicated region
  $region10: #{mlp_pallas.1} parent=0 // pred_check
    _
  $region11: #{mlp_pallas.1} parent=0 // pred_check_branch
    %15 = sbr.rel (0) target = $region13
  $region12: #{mlp_pallas.1} parent=0 // pred_region
    _
  $region13: #{mlp_pallas.1} parent=0 // pred_fallthru
    _
  // Predicated region
  $region14: #{mlp_pallas.1} parent=0 // pred_check
    _
  $region15: #{mlp_pallas.1} parent=0 // pred_check_branch
    %17 = sbr.rel (0) target = $region17
  $region16: #{mlp_pallas.1} parent=0 // pred_region
    _
  $region17: #{mlp_pallas.1} parent=0 // pred_fallthru
    _
  // Predicated region
  $region18: #{mlp_pallas.1} parent=0 // pred_check
    _
  $region19: #{mlp_pallas.1} parent=0 // pred_check_branch
    %19 = sbr.rel (0) target = $region21
  $region20: #{mlp_pallas.1} parent=0 // pred_region
    _
  $region21: #{mlp_pallas.1} parent=0 // pred_fallthru
    _
  %v21 = vld [vmem:[%s0] sm:$0xff]
  %v22 = vld [vmem:[%s0 + $0x8] sm:$0xff]
  %v23 = vpack.c.bf16 %v22, %v21
  %v24 = vld [vmem:[%s1] sm:$0xf]
  %v25 = vld [vmem:[%s1 + $0x4] sm:$0xf]
  %v26 = vld [vmem:[%s1 + $0x8] sm:$0xf]
  %v27 = vld [vmem:[%s1 + $0xc] sm:$0xf]
  %v28 = vld [vmem:[%s2] sm:$0x1]
  %v30 = vlaneseq
  %v31 = vshrl.u32 %v30, 7
  %v32 = vsub.s32 0, %v31
  %v33 = vrot.slane %v28, %v32
  %v39 = vunpack.c.l.b16 %v24
  %v40 = vunpack.c.l.b16 %v25
  %v41 = vunpack.c.l.b16 %v26
  %v42 = vunpack.c.l.b16 %v27
  %v43 = vpack.c.b16 %v40, %v39
  %v44 = vpack.c.b16 %v42, %v41
  %vm47 = vcmask 261120
  %v49 = vsel %vm47, %v23, 0
  %51 = vmatprep.subr.bf16.mxu0 0
  %52 = vmatpush1.bf16.msra.mxu0 0
  %53 = vmatprep.subr.bf16.mxu0 0
  %54 = vmatpush1.bf16.msra.mxu0 0
  %55 = vmatprep.subr.bf16.mxu0 0
  %56 = vmatpush1.bf16.msra.mxu0 0
  %57 = vmatprep.subr.bf16.mxu0 0
  %58 = vmatpush1.bf16.msra.mxu0 0
  %59 = vmatprep.subr.bf16.mxu0 0
  %60 = vmatpush1.bf16.msra.mxu0 0
  %61 = vmatprep.subr.bf16.mxu0 0
  %62 = vmatpush1.bf16.msra.mxu0 0
  %63 = vmatprep.subr.bf16.mxu0 0
  %64 = vmatpush1.bf16.msra.mxu0 %v44
  %65 = vmatprep.subr.bf16.mxu0 0
  %66 = vmatpush1.bf16.msra.mxu0 %v43
  %67 = vmatprep.subr.bf16.mxu0 0
  %68 = vmatpush2.bf16.msra.mxu0 0
  %69 = vmatprep.subr.bf16.mxu0 0
  %70 = vmatpush2.bf16.msra.mxu0 0
  %71 = vmatprep.subr.bf16.mxu0 0
  %72 = vmatpush2.bf16.msra.mxu0 0
  %73 = vmatprep.subr.bf16.mxu0 0
  %74 = vmatpush2.bf16.msra.mxu0 0
  %75 = vmatprep.subr.bf16.mxu0 0
  %76 = vmatpush2.bf16.msra.mxu0 0
  %77 = vmatprep.subr.bf16.mxu0 0
  %78 = vmatpush2.bf16.msra.mxu0 0
  %79 = vmatprep.subr.bf16.mxu0 0
  %80 = vmatpush2.bf16.msra.mxu0 0
  %81 = vmatprep.subr.bf16.mxu0 0
  %82 = vmatpush2.bf16.msra.mxu0 0
  %83 = vmatprep.mubr.bf16.mxu0 0
  %84 = vmatmul.mubr.bf16.gmra.mxu0 %v49
  %v85 = vpop.f32.mrf.mxu0
  %v86 = vadd.f32 %v33, %v85
  %v87 = vpop.f32.mrf.mxu0
  %v88 = vpop.f32.mrf.mxu0
  %v89 = vadd.f32 %v33, %v88
  %v90 = vpop.f32.mrf.mxu0
  %91 = vdwg.mxu0
  %v92 = vmul.f32 %v86, 0.5
  %v93 = vmul.f32 %v89, 0.5
  %v94 = vmul.f32 %v86, 0.044715
  %v95 = vmul.f32 %v89, 0.044715
  %v96 = vmul.f32 %v94, %v86
  %v97 = vmul.f32 %v95, %v89
  %v98 = vmul.f32 %v96, %v86
  %v99 = vmul.f32 %v97, %v89
  %v100 = vadd.f32 %v86, %v98
  %v101 = vadd.f32 %v89, %v99
  %v102 = vmul.f32 %v100, 0.7978846
  %v103 = vmul.f32 %v101, 0.7978846
  %v104 = vtanh.pop %v102
  %v105 = vtanh.pop %v103
  %v106 = vadd.f32 %v104, 1.0
  %v107 = vadd.f32 %v105, 1.0
  %v108 = vmul.f32 %v92, %v106
  %v109 = vmul.f32 %v93, %v107
  %v110 = vpack.c.bf16 %v109, %v108
  %v111 = vld [vmem:[%s3] sm:$0xf]
  %v112 = vld [vmem:[%s3 + $0x4] sm:$0xf]
  %v113 = vld [vmem:[%s3 + $0x8] sm:$0xf]
  %v114 = vld [vmem:[%s3 + $0xc] sm:$0xf]
  %v115 = vld [vmem:[%s3 + $0x10] sm:$0xf]
  %v116 = vld [vmem:[%s3 + $0x14] sm:$0xf]
  %v117 = vld [vmem:[%s3 + $0x18] sm:$0xf]
  %v118 = vld [vmem:[%s3 + $0x1c] sm:$0xf]
  %v119 = vld [vmem:[%s3 + $0x20] sm:$0xf]
  %v120 = vld [vmem:[%s3 + $0x24] sm:$0xf]
  %v121 = vld [vmem:[%s3 + $0x28] sm:$0xf]
  %v122 = vld [vmem:[%s3 + $0x2c] sm:$0xf]
  %v123 = vld [vmem:[%s3 + $0x30] sm:$0xf]
  %v124 = vld [vmem:[%s3 + $0x34] sm:$0xf]
  %v125 = vld [vmem:[%s3 + $0x38] sm:$0xf]
  %v126 = vld [vmem:[%s3 + $0x3c] sm:$0xf]
  %v127 = vld [vmem:[%s4] sm:$0x1]
  %v129 = vlaneseq
  %v130 = vshrl.u32 %v129, 7
  %v131 = vsub.s32 0, %v130
  %v132 = vrot.slane %v127, %v131
  %v150 = vunpack.c.l.b16 %v111
  %v151 = vunpack.c.l.b16 %v112
  %v152 = vunpack.c.l.b16 %v113
  %v153 = vunpack.c.l.b16 %v114
  %v154 = vunpack.c.l.b16 %v115
  %v155 = vunpack.c.l.b16 %v116
  %v156 = vunpack.c.l.b16 %v117
  %v157 = vunpack.c.l.b16 %v118
  %v158 = vunpack.c.l.b16 %v119
  %v159 = vunpack.c.l.b16 %v120
  %v160 = vunpack.c.l.b16 %v121
  %v161 = vunpack.c.l.b16 %v122
  %v162 = vunpack.c.l.b16 %v123
  %v163 = vunpack.c.l.b16 %v124
  %v164 = vunpack.c.l.b16 %v125
  %v165 = vunpack.c.l.b16 %v126
  %v166 = vpack.c.b16 %v151, %v150
  %v167 = vpack.c.b16 %v153, %v152
  %v168 = vpack.c.b16 %v155, %v154
  %v169 = vpack.c.b16 %v157, %v156
  %v170 = vpack.c.b16 %v159, %v158
  %v171 = vpack.c.b16 %v161, %v160
  %v172 = vpack.c.b16 %v163, %v162
  %v173 = vpack.c.b16 %v165, %v164
  %182 = vmatprep.subr.bf16.mxu0 0
  %183 = vmatpush1.bf16.msra.mxu0 %v173
  %184 = vmatprep.subr.bf16.mxu0 0
  %185 = vmatpush1.bf16.msra.mxu0 %v172
  %186 = vmatprep.subr.bf16.mxu0 0
  %187 = vmatpush1.bf16.msra.mxu0 %v171
  %188 = vmatprep.subr.bf16.mxu0 0
  %189 = vmatpush1.bf16.msra.mxu0 %v170
  %190 = vmatprep.subr.bf16.mxu0 0
  %191 = vmatpush1.bf16.msra.mxu0 %v169
  %192 = vmatprep.subr.bf16.mxu0 0
  %193 = vmatpush1.bf16.msra.mxu0 %v168
  %194 = vmatprep.subr.bf16.mxu0 0
  %195 = vmatpush1.bf16.msra.mxu0 %v167
  %196 = vmatprep.subr.bf16.mxu0 0
  %197 = vmatpush1.bf16.msra.mxu0 %v166
  %198 = vmatprep.subr.bf16.mxu0 0
  %199 = vmatpush2.bf16.msra.mxu0 0
  %200 = vmatprep.subr.bf16.mxu0 0
  %201 = vmatpush2.bf16.msra.mxu0 0
  %202 = vmatprep.subr.bf16.mxu0 0
  %203 = vmatpush2.bf16.msra.mxu0 0
  %204 = vmatprep.subr.bf16.mxu0 0
  %205 = vmatpush2.bf16.msra.mxu0 0
  %206 = vmatprep.subr.bf16.mxu0 0
  %207 = vmatpush2.bf16.msra.mxu0 0
  %208 = vmatprep.subr.bf16.mxu0 0
  %209 = vmatpush2.bf16.msra.mxu0 0
  %210 = vmatprep.subr.bf16.mxu0 0
  %211 = vmatpush2.bf16.msra.mxu0 0
  %212 = vmatprep.subr.bf16.mxu0 0
  %213 = vmatpush2.bf16.msra.mxu0 0
  %214 = vmatprep.mubr.bf16.mxu0 0
  %215 = vmatmul.mubr.bf16.gmra.mxu0 %v110
  %v216 = vpop.f32.mrf.mxu0
  %v217 = vadd.f32 %v132, %v216
  %v218 = vpop.f32.mrf.mxu0
  %v219 = vpop.f32.mrf.mxu0
  %v220 = vadd.f32 %v132, %v219
  %v221 = vpop.f32.mrf.mxu0
  %222 = vdwg.mxu0
  %223 = vst.msk [vmem:[%s5] sm:$0xff] %vm47, %v217
  %224 = vst.msk [vmem:[%s5 + $0x8] sm:$0xff] %vm47, %v220
  // Predicated region
  $region22: #{mlp_pallas.1} parent=0 // pred_check
    _
  $region23: #{mlp_pallas.1} parent=0 // pred_check_branch
    %226 = sbr.rel (0) target = $region25
  $region24: #{mlp_pallas.1} parent=0 // pred_region
    _
  $region25: #{mlp_pallas.1} parent=0 // pred_fallthru
    _
  // Predicated region
  $region26: #{mlp_pallas.1} parent=0 // pred_check
    _
  $region27: #{mlp_pallas.1} parent=0 // pred_check_branch
    %228 = sbr.rel (0) target = $region29
  $region28: #{mlp_pallas.1} parent=0 // pred_region
    _
  $region29: #{mlp_pallas.1} parent=0 // pred_fallthru
    _

</llo_original>
